<compile_context>
chip_gen: v7x
topology: tpu7x:2x2x1
jax: 0.10.0
libtpu: 0.0.40
codegen_flags: <defaults>
</compile_context>

<pallas_src>
import math

import jax
import jax.numpy as jnp
from jax.experimental import pallas as pl
from jax.experimental.pallas import tpu as pltpu


def pcmn_forward(x, alpha, beta):
    """x: (B, R, C) float array; alpha, beta: (C,).  Returns (B, R, C) in x.dtype."""
    B, R, C = x.shape
    out_dtype = x.dtype
    elem_bytes = x.dtype.itemsize
    alpha = alpha.astype(jnp.float32)
    beta = beta.astype(jnp.float32)

    # ---- Lane density via a FREE frame-axis fold: (B, R, C) -> (B, R//G, G*C).
    # Row-major reshape only (no HBM copy / transpose).  Column groups stay
    # independent; the full per-column row-sum is recovered in-kernel with rolls.
    G = 1
    if C < 128:
        g = 128 // math.gcd(128, C)      # smallest power-of-two G with (G*C) % 128 == 0
        while g > 1 and R % g != 0:      # G must evenly divide the frame axis
            g //= 2
        G = g
    Rf, CL = R // G, G * C
    x_f = x.reshape(B, Rf, CL)
    if G > 1:
        alpha_f = jnp.tile(alpha, (G,)).reshape(1, 1, CL)
        beta_f = jnp.tile(beta, (G,)).reshape(1, 1, CL)
    else:
        alpha_f = alpha.reshape(1, 1, CL)
        beta_f = beta.reshape(1, 1, CL)

    # ---- VMEM / block sizing from the device (v7x: 64 MiB/TC, v5e/v6e: 128 MiB).
    try:
        vmem_cap = int(getattr(pltpu.get_tpu_info(), "vmem_capacity_bytes",
                               64 * 1024 * 1024))
    except Exception:
        vmem_cap = 64 * 1024 * 1024
    vmem_limit = min(64 * 1024 * 1024, vmem_cap // 2)
    budget_bytes = vmem_limit // 2
    # Live VMEM per element: double-buffered input + double-buffered output.
    per_elem_vmem = 4 * elem_bytes
    utt_bytes = R * C * per_elem_vmem
    bt = max(1, min(B, budget_bytes // max(1, utt_bytes)))
    # Keep >= 2 grid steps per TensorCore (>= 4 total) so DMA stays pipelined.
    if B >= 4:
        bt = min(bt, B // 4)
    elif B >= 2:
        bt = min(bt, B // 2)
    bt = max(1, bt)
    num_blocks = pl.cdiv(B, bt)          # ragged trailing batch block is allowed
    # TODO(synk): add an R-tiled two-pass (sum then subtract) path for single
    # utterances too large for one (1, R//G, G*C) block to fit the VMEM budget.

    inv_rows = 1.0 / R                    # true utterance length, NOT the folded block R

    def kernel(x_ref, alpha_ref, beta_ref, o_ref):
        x_blk = x_ref[...]                                               # caller's dtype
        # Per-(group, column) partial row-sums, f32 accumulation (no f32 copy).
        part = jnp.sum(x_blk, axis=1, keepdims=True, dtype=jnp.float32)  # (bt, 1, CL)
        # Combine the G column groups with lane rotations (XLU slot has slack).
        # After log2(G) roll+add steps every lane holds the full per-column
        # row-sum, already tiled G times across the lane axis.
        total = part
        s = C
        while s < CL:
            total = total + pltpu.roll(total, shift=s, axis=2)
            s *= 2
        scaled_norm = alpha_ref[...] * (total * inv_rows)                # (bt, 1, CL) f32
        o_ref[...] = (beta_ref[...] * x_blk - scaled_norm).astype(o_ref.dtype)

    total_elems = B * R * C
    cost = pl.CostEstimate(
        flops=4 * total_elems,
        transcendentals=0,
        bytes_accessed=2 * total_elems * elem_bytes + 2 * 4 * CL,
    )

    out_f = pl.pallas_call(
        kernel,
        out_shape=jax.ShapeDtypeStruct((B, Rf, CL), out_dtype),
        grid_spec=pltpu.PrefetchScalarGridSpec(
            num_scalar_prefetch=0,
            grid=(num_blocks,),
            in_specs=[
                pl.BlockSpec((bt, Rf, CL), lambda b: (b, 0, 0)),   # utterance block
                pl.BlockSpec((1, 1, CL), lambda b: (0, 0, 0)),     # alpha (shared)
                pl.BlockSpec((1, 1, CL), lambda b: (0, 0, 0)),     # beta (shared)
            ],
            out_specs=pl.BlockSpec((bt, Rf, CL), lambda b: (b, 0, 0)),
        ),
        compiler_params=pltpu.CompilerParams(
            dimension_semantics=("parallel",),
            vmem_limit_bytes=vmem_limit,
        ),
        cost_estimate=cost,
    )(x_f, alpha_f, beta_f)

    return out_f.reshape(B, R, C)         # free row-major un-fold


def pcmn_reference(x, alpha, beta):
    xf = x.astype(jnp.float32)
    norm = jnp.mean(xf, axis=1, keepdims=True)                      # (B, 1, C)
    return (beta[None, None, :] * xf - alpha[None, None, :] * norm).astype(x.dtype)


if __name__ == "__main__":
    key = jax.random.PRNGKey(0)
    k_x, k_a, k_x2, k_a2 = jax.random.split(key, 4)

    # --- Primary check: small shapes consistent with the module (C = in_dim). ---
    B, R, C = 2, 8, 32
    x = jax.random.normal(k_x, (B, R, C), dtype=jnp.float32)
    # xavier_normal_ is ill-defined on a 1-D tensor; deterministic small-std stand-in.
    alpha = 0.1 * jax.random.normal(k_a, (C,), dtype=jnp.float32)
    beta = jnp.ones((C,), dtype=jnp.float32)   # requires_grad=False in torch; constant here

    out = pcmn_forward(x, alpha, beta)
    jax.block_until_ready(out)
    ref = pcmn_reference(x, alpha, beta)
    assert out.shape == (B, R, C)
    assert out.dtype == x.dtype
    assert jnp.allclose(out, ref, atol=1e-5, rtol=1e-5), "mismatch vs reference (primary)"

    # --- Secondary check: exercises the frame-axis fold + ragged trailing batch block. ---
    B2, R2, C2 = 11, 6, 64
    x2 = jax.random.normal(k_x2, (B2, R2, C2), dtype=jnp.float32)
    alpha2 = 0.1 * jax.random.normal(k_a2, (C2,), dtype=jnp.float32)
    beta2 = jnp.ones((C2,), dtype=jnp.float32)

    out2 = pcmn_forward(x2, alpha2, beta2)
    jax.block_until_ready(out2)
    ref2 = pcmn_reference(x2, alpha2, beta2)
    assert jnp.allclose(out2, ref2, atol=1e-5, rtol=1e-5), "mismatch vs reference (ragged)"

    print("KERNEL_OK")
</pallas_src>

<mosaic_0001>
module attributes {stable_mosaic.version = 11 : i64} {
  func.func @kernel(%arg0: i32, %arg1: memref<1x2x128xf32, #tpu.memory_space<vmem>>, %arg2: memref<1x1x128xf32, #tpu.memory_space<vmem>>, %arg3: memref<1x1x128xf32, #tpu.memory_space<vmem>>, %arg4: memref<1x2x128xf32, #tpu.memory_space<vmem>>) attributes {dimension_semantics = [#tpu.dimension_semantics<parallel>], iteration_bounds = array<i64: 2>, scalar_prefetch = 0 : i64, scratch_operands = 0 : i64, tpu.core_type = #tpu.core_type<tc>, window_params = [{transform_indices = @transform_0, window_bounds = array<i64: 1, 2, 128>}, {pipeline_mode = #tpu.pipeline_mode<synchronous>, transform_indices = @transform_1, window_bounds = array<i64: 1, 1, 128>}, {pipeline_mode = #tpu.pipeline_mode<synchronous>, transform_indices = @transform_2, window_bounds = array<i64: 1, 1, 128>}, {transform_indices = @transform_3, window_bounds = array<i64: 1, 2, 128>}]} {
    %c0 = arith.constant 0 : index
    %c0_0 = arith.constant 0 : index
    %c0_1 = arith.constant 0 : index
    %0 = vector.load %arg1[%c0, %c0_0, %c0_1] : memref<1x2x128xf32, #tpu.memory_space<vmem>>, vector<1x2x128xf32>
    %cst = arith.constant dense<0.000000e+00> : vector<1x128xf32>
    %1 = vector.multi_reduction <add>, %0, %cst [1] : vector<1x2x128xf32> to vector<1x128xf32>
    %2 = vector.shape_cast %1 : vector<1x128xf32> to vector<1x1x128xf32>
    %c32_i32 = arith.constant 32 : i32
    %3 = tpu.dynamic_rotate %2 by %c32_i32 dim 2 : vector<1x1x128xf32>, i32 -> vector<1x1x128xf32>
    %4 = arith.addf %2, %3 : vector<1x1x128xf32>
    %c64_i32 = arith.constant 64 : i32
    %5 = tpu.dynamic_rotate %4 by %c64_i32 dim 2 : vector<1x1x128xf32>, i32 -> vector<1x1x128xf32>
    %6 = arith.addf %4, %5 : vector<1x1x128xf32>
    %c0_2 = arith.constant 0 : index
    %c0_3 = arith.constant 0 : index
    %c0_4 = arith.constant 0 : index
    %7 = vector.load %arg2[%c0_2, %c0_3, %c0_4] : memref<1x1x128xf32, #tpu.memory_space<vmem>>, vector<1x1x128xf32>
    %cst_5 = arith.constant 1.250000e-01 : f32
    %8 = vector.broadcast %cst_5 : f32 to vector<1x1x128xf32>
    %9 = arith.mulf %6, %8 : vector<1x1x128xf32>
    %10 = arith.mulf %7, %9 : vector<1x1x128xf32>
    %c0_6 = arith.constant 0 : index
    %c0_7 = arith.constant 0 : index
    %c0_8 = arith.constant 0 : index
    %11 = vector.load %arg3[%c0_6, %c0_7, %c0_8] : memref<1x1x128xf32, #tpu.memory_space<vmem>>, vector<1x1x128xf32>
    %12 = vector.broadcast %11 : vector<1x1x128xf32> to vector<1x2x128xf32>
    %13 = arith.mulf %12, %0 : vector<1x2x128xf32>
    %14 = vector.broadcast %10 : vector<1x1x128xf32> to vector<1x2x128xf32>
    %15 = arith.subf %13, %14 : vector<1x2x128xf32>
    %c0_9 = arith.constant 0 : index
    %c0_10 = arith.constant 0 : index
    %c0_11 = arith.constant 0 : index
    %16 = vector.load %arg4[%c0_9, %c0_10, %c0_11] : memref<1x2x128xf32, #tpu.memory_space<vmem>>, vector<1x2x128xf32>
    tpu.vector_store %arg4[%c0_9, %c0_10, %c0_11], %15 {strides = array<i32>} : memref<1x2x128xf32, #tpu.memory_space<vmem>>, vector<1x2x128xf32>,
    return
  }
  func.func @transform_0(%arg0: i32) -> (i32, i32, i32) {
    %c0_i32 = arith.constant 0 : i32
    %c0_i32_0 = arith.constant 0 : i32
    %c0_i32_1 = arith.constant 0 : i32
    return %arg0, %c0_i32, %c0_i32_0 : i32, i32, i32
  }
  func.func @transform_1(%arg0: i32) -> (i32, i32, i32) {
    %c0_i32 = arith.constant 0 : i32
    %c0_i32_0 = arith.constant 0 : i32
    %c0_i32_1 = arith.constant 0 : i32
    %c0_i32_2 = arith.constant 0 : i32
    return %c0_i32, %c0_i32_0, %c0_i32_1 : i32, i32, i32
  }
  func.func @transform_2(%arg0: i32) -> (i32, i32, i32) {
    %c0_i32 = arith.constant 0 : i32
    %c0_i32_0 = arith.constant 0 : i32
    %c0_i32_1 = arith.constant 0 : i32
    %c0_i32_2 = arith.constant 0 : i32
    return %c0_i32, %c0_i32_0, %c0_i32_1 : i32, i32, i32
  }
  func.func @transform_3(%arg0: i32) -> (i32, i32, i32) {
    %c0_i32 = arith.constant 0 : i32
    %c0_i32_0 = arith.constant 0 : i32
    %c0_i32_1 = arith.constant 0 : i32
    return %arg0, %c0_i32, %c0_i32_0 : i32, i32, i32
  }
}

</mosaic_0001>

<llo_original>
// kernel: tpu_custom_call.1
$region0: #{tpu_custom_call.1}
  #allocation0 [shape = 'u32[]', space=smem, size = 0x4, offset = 0x4, fixed_abs, tag = 'smem constant byte address 0x4 - core index']
  #allocation1 [shape = 'u32[144,128]{1,0:T(1,128)}', space=vmem, size = 0x12000, scoped, tag = 'internal scratch']
  %s0 = inlined_call_operand.hbm [shape: f32[2,2,128], index: 0, kind: input, shape index: {}]
  %s1 = inlined_call_operand.vmem [shape: f32[1,1,128], index: 1, kind: input, shape index: {}]
  %s2 = inlined_call_operand.vmem [shape: f32[1,1,128], index: 2, kind: input, shape index: {}]
  %s3 = inlined_call_operand.hbm [shape: f32[2,2,128], index: 3, kind: output, shape index: {}]
  %s4 = sld [smem:[#allocation0]]
  $region49: #{tpu_custom_call.1} parent=0
    _
  %s6 = ssub.s32 1, %s4
  %s7 = scalar_select 0, %s6, %s4
  $region1: #{tpu_custom_call.1} parent=0
    #allocation2 [shape = 'u8[2048]{0}', space=vmem, size = 0x800, scoped, tag = 'input window, operand 0']
    #allocation3 [shape = 's32[2]{0}', space=sflag, size = 0x8, scoped, tag = 'scoped memory for tpu_custom_call.1']
    #allocation4 [shape = 's32[2]{0}', space=sflag, size = 0x8, scoped, tag = 'scoped memory for tpu_custom_call.1']
    #allocation5 [shape = 'u8[2048]{0}', space=vmem, size = 0x800, scoped, tag = 'output window, operand 0']
    %8 = vsyncpa [#allocation3], 0
    %s9 = scalar_lea.sflag [#allocation3], 1
    %10 = vsyncpa %s9, 0
    %11 = vsyncpa [#allocation4], 0
    %s12 = scalar_lea.sflag [#allocation4], 1
    %13 = vsyncpa %s12, 0
    loop: start=0, step=1, limit=4
    $region2: #{tpu_custom_call.1} parent=1 // loop_pre_header
      _
    $region3: #{tpu_custom_call.1} parent=1 // loop_header
      %s15 = sphi 0, %s19
      %p16 = scmp.ge.s32.totalorder %s15, 4
      %s25 = sphi 0, %s27
      %s28 = sphi 0, %s25
      %s29 = sphi 0, %s28
      %s45 = sphi 0, %s29
      %s49 = sphi 0, %s49
      %s51 = sphi 0, %s49
      %s52 = sphi 0, %s51
      %s66 = sphi 0, %s52
      %s70 = sphi 0, %s70
      %s72 = sphi 0, %s70
      %s73 = sphi 0, %s72
      %s87 = sphi 0, %s73
      %s93 = sphi 0, %s95
      %s96 = sphi 0, %s93
      %s97 = sphi 0, %s96
      %s113 = sphi 0, %s97
    $region4: #{tpu_custom_call.1} parent=1 // loop_header_branch
      %18 = sbr.rel (%p16) target = $region8
    $region5: #{tpu_custom_call.1} parent=1 // loop_body
      %s20 = ssub.s32 %s15, 1
      %s21 = ssub.s32 %s15, 2
      %s22 = sadd.s32 %s15, 1
      %s23 = ssub.s32 %s15, %s22
      %p24 = scmp.eq.s32.totalorder %s23, 0
      %s26 = sadd.s32 %s25, 1
      %s27 = scalar_select %p24, %s25, %s26
      %p30 = pneg %p24
      %p31 = scmp.eq.s32.totalorder %s15, 1
      %p32 = por %p30, %p31
      %p33 = scmp.ne.s32.totalorder %s25, %s28
      %p34 = scmp.eq.s32.totalorder %s15, 0
      %p35 = por %p33, %p34
      %p36 = scmp.ne.s32.totalorder %s25, %s28
      %p37 = scmp.eq.s32.totalorder %s20, 1
      %p38 = por %p36, %p37
      %p39 = scmp.ne.s32.totalorder %s28, %s29
      %p40 = scmp.eq.s32.totalorder %s20, 0
      %p41 = por %p39, %p40
      %p42 = scmp.ne.s32.totalorder %s28, %s29
      %p43 = scmp.eq.s32.totalorder %s21, 1
      %p44 = por %p42, %p43
      %p46 = scmp.ne.s32.totalorder %s29, %s45
      %p47 = scmp.eq.s32.totalorder %s21, 0
      %p48 = por %p46, %p47
      %s50 = sadd.s32 %s49, 1
      %p53 = scmp.eq.s32.totalorder %s15, 1
      %p54 = scmp.ne.s32.totalorder %s49, %s51
      %p55 = scmp.eq.s32.totalorder %s15, 0
      %p56 = por %p54, %p55
      %p57 = scmp.ne.s32.totalorder %s49, %s51
      %p58 = scmp.eq.s32.totalorder %s20, 1
      %p59 = por %p57, %p58
      %p60 = scmp.ne.s32.totalorder %s51, %s52
      %p61 = scmp.eq.s32.totalorder %s20, 0
      %p62 = por %p60, %p61
      %p63 = scmp.ne.s32.totalorder %s51, %s52
      %p64 = scmp.eq.s32.totalorder %s21, 1
      %p65 = por %p63, %p64
      %p67 = scmp.ne.s32.totalorder %s52, %s66
      %p68 = scmp.eq.s32.totalorder %s21, 0
      %p69 = por %p67, %p68
      %s71 = sadd.s32 %s70, 1
      %p74 = scmp.eq.s32.totalorder %s15, 1
      %p75 = scmp.ne.s32.totalorder %s70, %s72
      %p76 = scmp.eq.s32.totalorder %s15, 0
      %p77 = por %p75, %p76
      %p78 = scmp.ne.s32.totalorder %s70, %s72
      %p79 = scmp.eq.s32.totalorder %s20, 1
      %p80 = por %p78, %p79
      %p81 = scmp.ne.s32.totalorder %s72, %s73
      %p82 = scmp.eq.s32.totalorder %s20, 0
      %p83 = por %p81, %p82
      %p84 = scmp.ne.s32.totalorder %s72, %s73
      %p85 = scmp.eq.s32.totalorder %s21, 1
      %p86 = por %p84, %p85
      %p88 = scmp.ne.s32.totalorder %s73, %s87
      %p89 = scmp.eq.s32.totalorder %s21, 0
      %p90 = por %p88, %p89
      %s91 = ssub.s32 %s15, %s22
      %p92 = scmp.eq.s32.totalorder %s91, 0
      %s94 = sadd.s32 %s93, 1
      %s95 = scalar_select %p92, %s93, %s94
      %p98 = pneg %p92
      %p99 = scmp.eq.s32.totalorder %s15, 1
      %p100 = por %p98, %p99
      %p101 = scmp.ne.s32.totalorder %s93, %s96
      %p102 = scmp.eq.s32.totalorder %s15, 0
      %p103 = por %p101, %p102
      %p104 = scmp.ne.s32.totalorder %s93, %s96
      %p105 = scmp.eq.s32.totalorder %s20, 1
      %p106 = por %p104, %p105
      %p107 = scmp.ne.s32.totalorder %s96, %s97
      %p108 = scmp.eq.s32.totalorder %s20, 0
      %p109 = por %p107, %p108
      %p110 = scmp.ne.s32.totalorder %s96, %s97
      %p111 = scmp.eq.s32.totalorder %s21, 1
      %p112 = por %p110, %p111
      %p114 = scmp.ne.s32.totalorder %s97, %s113
      %p115 = scmp.eq.s32.totalorder %s21, 0
      %p116 = por %p114, %p115
      %p117 = scmp.le.s32.totalorder 1, %s15
      %p118 = scmp.lt.s32.totalorder %s15, 3
      %p119 = pnand %p117, %p118
      %p120 = pneg %p119
      // Predicated region
      $region9: #{tpu_custom_call.1} parent=5 // pred_check
        _
      $region10: #{tpu_custom_call.1} parent=5 // pred_check_branch
        %122 = sbr.rel (%p119) target = $region12
      $region11: #{tpu_custom_call.1} parent=5 // pred_region
        %s123 = ssub.s32 %s15, 1
        // Predicated region
        $region13: #{tpu_custom_call.1} parent=11 // pred_check
          %p124 = pneg %p62
        $region14: #{tpu_custom_call.1} parent=11 // pred_check_branch
          %126 = sbr.rel (%p124) target = $region16
        $region15: #{tpu_custom_call.1} parent=11 // pred_region
          _
        $region16: #{tpu_custom_call.1} parent=11 // pred_fallthru
          _
        // Predicated region
        $region17: #{tpu_custom_call.1} parent=11 // pred_check
          %p127 = pneg %p83
        $region18: #{tpu_custom_call.1} parent=11 // pred_check_branch
          %129 = sbr.rel (%p127) target = $region20
        $region19: #{tpu_custom_call.1} parent=11 // pred_region
          _
        $region20: #{tpu_custom_call.1} parent=11 // pred_fallthru
          _
      $region12: #{tpu_custom_call.1} parent=5 // pred_fallthru
        _
      %p130 = scmp.lt.s32.totalorder %s15, 2
      // Predicated region
      $region21: #{tpu_custom_call.1} parent=5 // pred_check
        %p131 = pneg %p130
      $region22: #{tpu_custom_call.1} parent=5 // pred_check_branch
        %133 = sbr.rel (%p131) target = $region24
      $region23: #{tpu_custom_call.1} parent=5 // pred_region
        // Predicated region
        $region25: #{tpu_custom_call.1} parent=23 // pred_check
          %p134 = pneg %p35
        $region26: #{tpu_custom_call.1} parent=23 // pred_check_branch
          %136 = sbr.rel (%p134) target = $region28
        $region27: #{tpu_custom_call.1} parent=23 // pred_region
          %s137 = sand.u32 %s25, 1
          %s138 = scalar_lea.sflag [#allocation3], %s137
          %s139 = sand.u32 %s25, 1
          %s140 = smul.addr %s139, 2
          %s141 = scalar_lea.vmem [#allocation2], %s140
          %s143 = ssub.s32 32, 32
          %144 = vsyncadd %s138, %s143
          %s145 = smul.addr %s15, 32
          %s146 = scalar_lea.hbm %s0, %s145
          %s148 = sshll.u32 %s141, 4
          %s149 = int_to_ptr.vmem [resolvable:$true] %s148
          %151 = dma.hbm_to_vmem [thread:$0]  %s146, 32, %s149, %s138
        $region28: #{tpu_custom_call.1} parent=23 // pred_fallthru
          _
      $region24: #{tpu_custom_call.1} parent=5 // pred_fallthru
        _
      %p152 = scmp.le.s32.totalorder 1, %s15
      %p153 = scmp.lt.s32.totalorder %s15, 3
      %p154 = pnand %p152, %p153
      %p155 = pneg %p154
      // Predicated region
      $region29: #{tpu_custom_call.1} parent=5 // pred_check
        _
      $region30: #{tpu_custom_call.1} parent=5 // pred_check_branch
        %157 = sbr.rel (%p154) target = $region32
      $region31: #{tpu_custom_call.1} parent=5 // pred_region
        %s158 = ssub.s32 %s15, 1
        %s159 = sand.u32 %s28, 1
        %s160 = scalar_lea.sflag [#allocation3], %s159
        %s161 = sand.u32 %s28, 1
        %s162 = smul.addr %s161, 2
        %s163 = scalar_lea.vmem [#allocation2], %s162
        // Predicated region
        $region33: #{tpu_custom_call.1} parent=31 // pred_check
          %p164 = pneg %p41
        $region34: #{tpu_custom_call.1} parent=31 // pred_check_branch
          %166 = sbr.rel (%p164) target = $region36
        $region35: #{tpu_custom_call.1} parent=31 // pred_region
          %167 = dma.done %s160, 32
        $region36: #{tpu_custom_call.1} parent=31 // pred_fallthru
          _
        %s168 = sand.u32 %s28, 1
        %s169 = scalar_lea.sflag [#allocation3], %s168
        %s170 = sand.u32 %s28, 1
        %s171 = smul.addr %s170, 2
        %s172 = scalar_lea.vmem [#allocation2], %s171
        %p173 = pneg %p41
        %p174 = pneg %p38
        %p175 = pneg %p62
        %p176 = pneg %p59
        %p177 = pneg %p83
        %p178 = pneg %p80
        %p179 = pneg %p109
        %p180 = pneg %p106
        %s181 = sand.u32 %s96, 1
        %s182 = scalar_lea.sflag [#allocation4], %s181
        %s183 = sand.u32 %s96, 1
        %s184 = smul.addr %s183, 2
        %s185 = scalar_lea.vmem [#allocation5], %s184
        %v186 = vld [vmem:[%s163] sm:$0x3]
        %vm187 = vcmask 1041408
        %v188 = vsel %vm187, %v186, 0.0
        %v189 = vrot.slane %v188, 4
        %v190 = vadd.f32 %v188, %v189
        %v191 = vrot.slane %v190, 2
        %v192 = vadd.f32 %v190, %v191
        %v193 = vrot.slane %v192, 1
        %v194 = vadd.f32 %v192, %v193
        %195 = vrot.lane.b32.xlu0 %v194, 32
        %v196 = vpop.permute.xlu0 %195
        %v197 = vadd.f32 %v194, %v196
        %198 = vrot.lane.b32.xlu0 %v197, 64
        %v199 = vpop.permute.xlu0 %198
        %v200 = vadd.f32 %v197, %v199
        %v201 = vld [vmem:[%s1] sm:$0x1]
        %v202 = vmul.f32 %v200, 0.125
        %v203 = vmul.f32 %v201, %v202
        %v204 = vld [vmem:[%s2] sm:$0x1]
        %v206 = vlaneseq
        %v207 = vshrl.u32 %v206, 7
        %v208 = vsub.s32 0, %v207
        %v209 = vrot.slane %v204, %v208
        %v211 = vmul.f32 %v209, %v186
        %v213 = vlaneseq
        %v214 = vshrl.u32 %v213, 7
        %v215 = vsub.s32 0, %v214
        %v216 = vrot.slane %v203, %v215
        %v218 = vsub.f32 %v211, %v216
        %219 = vst [vmem:[%s185] sm:$0x3] %v218
        %s220 = sand.u32 %s96, 1
        %s221 = scalar_lea.sflag [#allocation4], %s220
        %s222 = sand.u32 %s96, 1
        %s223 = smul.addr %s222, 2
        %s224 = scalar_lea.vmem [#allocation5], %s223
        // Predicated region
        $region37: #{tpu_custom_call.1} parent=31 // pred_check
          %p225 = pneg %p106
        $region38: #{tpu_custom_call.1} parent=31 // pred_check_branch
          %227 = sbr.rel (%p225) target = $region40
        $region39: #{tpu_custom_call.1} parent=31 // pred_region
          %s229 = ssub.s32 32, 32
          %230 = vsyncadd %s221, %s229
          %s231 = smul.addr %s20, 32
          %s232 = scalar_lea.hbm %s3, %s231
          %s234 = sshll.u32 %s224, 4
          %s235 = int_to_ptr.vmem [resolvable:$true] %s234
          %237 = dma.vmem_to_hbm [thread:$0]  %s235, 32, %s232, %s221
        $region40: #{tpu_custom_call.1} parent=31 // pred_fallthru
          _
      $region32: #{tpu_custom_call.1} parent=5 // pred_fallthru
        _
      %p238 = scmp.le.s32.totalorder 2, %s15
      // Predicated region
      $region41: #{tpu_custom_call.1} parent=5 // pred_check
        %p239 = pneg %p238
      $region42: #{tpu_custom_call.1} parent=5 // pred_check_branch
        %241 = sbr.rel (%p239) target = $region44
      $region43: #{tpu_custom_call.1} parent=5 // pred_region
        %s242 = ssub.s32 %s15, 2
        // Predicated region
        $region45: #{tpu_custom_call.1} parent=43 // pred_check
          %p243 = pneg %p112
        $region46: #{tpu_custom_call.1} parent=43 // pred_check_branch
          %245 = sbr.rel (%p243) target = $region48
        $region47: #{tpu_custom_call.1} parent=43 // pred_region
          %s246 = sand.u32 %s97, 1
          %s247 = scalar_lea.sflag [#allocation4], %s246
          %s248 = sand.u32 %s97, 1
          %s249 = smul.addr %s248, 2
          %s250 = scalar_lea.vmem [#allocation5], %s249
          %251 = dma.done %s247, 32
        $region48: #{tpu_custom_call.1} parent=43 // pred_fallthru
          _
      $region44: #{tpu_custom_call.1} parent=5 // pred_fallthru
        _
    $region6: #{tpu_custom_call.1} parent=1 // loop_footer
      %s19 = sadd.s32 1, %s15
    $region7: #{tpu_custom_call.1} parent=1 // loop_footer_branch
      %14 = sbr.rel target = $region3
    $region8: #{tpu_custom_call.1} parent=1 // loop_exit
      _
    %252 = vsyncpa [#allocation3], 1
    %s253 = scalar_lea.sflag [#allocation3], 1
    %254 = vsyncpa %s253, 1
    %255 = vsyncpa [#allocation4], 1
    %s256 = scalar_lea.sflag [#allocation4], 1
    %257 = vsyncpa %s256, 1

</llo_original>
